<compile_context>
chip_gen: v7x
topology: tpu7x:2x2x1
jax: 0.10.0
libtpu: 0.0.40
codegen_flags: <defaults>
</compile_context>

<pallas_src>
import functools
import math

import jax
import jax.numpy as jnp
from jax.experimental import pallas as pl
from jax.experimental.pallas import tpu as pltpu


# ----------------------------- Pallas kernels --------------------------------

def _patch_embed_kernel(patches_ref, w_ref, b_ref, out_ref):
    """patches: (TM, C*P*P) bf16, w: (C*P*P, D) bf16, b: (1, D) f32 -> (TM, D) f32.

    Equivalent to the stride=patch_size Conv2d of DINOv2's PatchEmbed (patches
    are im2col'ed in (c, p, q) order to match the torch weight layout).
    """
    out_ref[...] = (
        jnp.dot(patches_ref[...], w_ref[...], preferred_element_type=jnp.float32)
        + b_ref[...]
    )


def _layernorm_rows(x, gamma, beta, eps=1e-6):
    # x: (M, D) f32, gamma/beta: (1, D) f32   (elementwise math stays f32:
    # v5e has no bf16 VPU/EUP path)
    mu = jnp.mean(x, axis=-1, keepdims=True)
    var = jnp.mean((x - mu) ** 2, axis=-1, keepdims=True)
    return (x - mu) * jax.lax.rsqrt(var + eps) * gamma + beta


def _gelu(x):
    # TODO(synk): DINOv2 uses exact (erf) GELU; tanh approximation used here
    # because it lowers cleanly to the EUP on TPU.
    c = 0.7978845608028654  # sqrt(2/pi)
    return 0.5 * x * (1.0 + jnp.tanh(c * (x + 0.044715 * x * x * x)))


def _fused_blocks_kernel(num_heads,
                         x_ref, cls_pos_ref, pos_patch_ref,
                         ln1_g_ref, ln1_b_ref,
                         qkv_w_ref, qkv_b_ref,
                         proj_w_ref, proj_b_ref,
                         ln2_g_ref, ln2_b_ref,
                         fc1_w_ref, fc1_b_ref,
                         fc2_w_ref, fc2_b_ref,
                         norm_g_ref, norm_b_ref,
                         out_ref,
                         state_ref):
    """All transformer blocks for one batch chunk; one layer per grid step.

    grid = (batch_chunks, L).  x_ref block is (Bc, N, D) patch tokens (consumed
    at layer 0 only); per-layer params are (1, r, c) slices of depth-stacked
    arrays; out_ref block is (Bc, 1, D) and holds the final-LayerNorm'ed CLS
    token (written at the last layer).  state_ref is a resident (Bc, T, D) f32
    VMEM scratch carrying the token state across layers.
    """
    layer = pl.program_id(1)
    n_layers = pl.num_programs(1)

    Bc, T, D = state_ref.shape
    N = T - 1
    H = num_heads
    dh = D // H
    M = Bc * T

    # ---- layer-0 init: cls token + positional embedding, fused in-kernel ----
    @pl.when(layer == 0)
    def _():
        cls_row = cls_pos_ref[...]                                   # (1, D)
        state_ref[:, pl.ds(0, 1), :] = jnp.broadcast_to(
            cls_row[None, :, :], (Bc, 1, D))
        state_ref[:, pl.ds(1, N), :] = (
            x_ref[...] + pos_patch_ref[...][None, :, :])

    x3 = state_ref[...]                       # (Bc, T, D) f32, resident state
    x2 = x3.reshape(M, D)                     # flat rows for the dense matmuls

    # ---- multi-head self-attention (heads batched) ----
    h = _layernorm_rows(x2, ln1_g_ref[0], ln1_b_ref[0])
    qkv = (jnp.dot(h.astype(jnp.bfloat16), qkv_w_ref[0],
                   preferred_element_type=jnp.float32)
           + qkv_b_ref[0])                    # (M, 3D) f32; q pre-scaled at init
    qkv3 = qkv.reshape(Bc, T, 3 * D)

    def split_heads(base):
        # head-major (Bc*H, T, dh): static lane slices + major-axis concat
        parts = [qkv3[:, :, base + hi * dh: base + (hi + 1) * dh][:, None]
                 for hi in range(H)]
        return jnp.concatenate(parts, axis=1).reshape(Bc * H, T, dh)

    qh = split_heads(0).astype(jnp.bfloat16)
    kh = split_heads(D).astype(jnp.bfloat16)
    vh = split_heads(2 * D).astype(jnp.bfloat16)

    # scores: batched over (Bc*H), contract the dh axis (q already scaled)
    s = jax.lax.dot_general(qh, kh, (((2,), (2,)), ((0,), (0,))),
                            preferred_element_type=jnp.float32)      # (BcH, T, T)
    s = s - jnp.max(s, axis=-1, keepdims=True)
    p = jnp.exp(s)
    p = p * pl.reciprocal(jnp.sum(p, axis=-1, keepdims=True), approx=True)
    o = jax.lax.dot_general(p.astype(jnp.bfloat16), vh,
                            (((2,), (1,)), ((0,), (0,))),
                            preferred_element_type=jnp.float32)      # (BcH, T, dh)

    # back to lane-dense (Bc, T, D): heads reassembled with one lane-axis concat
    o4 = o.reshape(Bc, H, T, dh)
    attn = jnp.concatenate([o4[:, hi] for hi in range(H)], axis=-1)  # (Bc, T, D)
    attn2 = (jnp.dot(attn.reshape(M, D).astype(jnp.bfloat16), proj_w_ref[0],
                     preferred_element_type=jnp.float32)
             + proj_b_ref[0])
    x2 = x2 + attn2

    # ---- MLP ----
    # TODO(synk): for real ViT-L/g sizes, K/N-tile qkv/fc1/fc2 (extra reduction
    # grid axis or pltpu.emit_pipeline) so double-buffered per-layer weights fit
    # v7x's 64 MiB physical VMEM.
    h = _layernorm_rows(x2, ln2_g_ref[0], ln2_b_ref[0])
    h = (jnp.dot(h.astype(jnp.bfloat16), fc1_w_ref[0],
                 preferred_element_type=jnp.float32)
         + fc1_b_ref[0])
    h = _gelu(h)
    h = (jnp.dot(h.astype(jnp.bfloat16), fc2_w_ref[0],
                 preferred_element_type=jnp.float32)
         + fc2_b_ref[0])
    x2 = x2 + h

    x3_new = x2.reshape(Bc, T, D)
    state_ref[...] = x3_new

    # Final LayerNorm on the CLS rows only, fused into the last layer.
    @pl.when(layer == n_layers - 1)
    def _():
        cls = x3_new[:, 0:1, :]                                       # (Bc, 1, D)
        mu = jnp.mean(cls, axis=-1, keepdims=True)
        var = jnp.mean((cls - mu) ** 2, axis=-1, keepdims=True)
        out_ref[...] = ((cls - mu) * jax.lax.rsqrt(var + 1e-6)
                        * norm_g_ref[...][None] + norm_b_ref[...][None])


# ------------------------------- wrappers -------------------------------------

def dinov2_backbone_forward(x, params, *, patch_size, num_heads,
                            out_features="last_feat", batch_chunk=None):
    """Mirrors DINOv2Backbone.forward: returns {out_features: dinov2_model(x)}."""
    B, C, H, W = x.shape
    P = patch_size
    nh, nw = H // P, W // P
    N = nh * nw
    D = params["patch_w"].shape[1]
    T = N + 1
    blk = params["blocks"]
    L = blk["qkv_w"].shape[0]
    hidden = blk["fc1_w"].shape[2]
    assert D % num_heads == 0

    # ---- patch embed ----
    # im2col (glue): (B*N, C*P*P), flattened in (c, p, q) order so the kernel
    # matmul matches torch Conv2d(weight (D, C, P, P), stride=P).  Cast to bf16
    # so the (BN, C*P*P) input DMA moves half the bytes.
    patches = (x.reshape(B, C, nh, P, nw, P)
                 .transpose(0, 2, 4, 1, 3, 5)
                 .reshape(B * N, C * P * P)).astype(jnp.bfloat16)
    kdim = C * P * P
    BN = B * N
    TM = min(512, BN)                      # fixed 512-row tile + padded tail
    tok = pl.pallas_call(
        _patch_embed_kernel,
        out_shape=jax.ShapeDtypeStruct((BN, D), jnp.float32),
        grid=(pl.cdiv(BN, TM),),
        in_specs=[pl.BlockSpec((TM, kdim), lambda i: (i, 0)),
                  pl.BlockSpec((kdim, D), lambda i: (0, 0)),
                  pl.BlockSpec((1, D), lambda i: (0, 0))],
        out_specs=pl.BlockSpec((TM, D), lambda i: (i, 0)),
        compiler_params=pltpu.CompilerParams(
            dimension_semantics=("parallel",)),
    )(patches, params["patch_w"], params["patch_b"])
    tok3 = tok.reshape(B, N, D)

    # Host-side prep only (tiny): pre-add pos embed to the cls token and split
    # the pos table; the cls/pos fusion itself happens inside the blocks kernel.
    # TODO(synk): hub DINOv2 interpolates pos embeddings and has LayerScale /
    # register tokens; none are modeled (no checkpoint available).
    cls_pos = params["cls_token"] + params["pos_embed"][0:1]     # (1, D)
    pos_patch = params["pos_embed"][1:]                          # (N, D)

    # ---- fused transformer blocks + final CLS LayerNorm ----
    # Batch folded into the layer step: grid = (batch_chunks, L).  Default is a
    # single chunk (weights DMA'd once per forward); set batch_chunk so that
    # cdiv(B, batch_chunk) >= 2 on v7x to shard chunks across its 2 TensorCores.
    Bc = B if batch_chunk is None else max(1, min(batch_chunk, B))
    num_chunks = pl.cdiv(B, Bc)

    param_args = (blk["ln1_g"], blk["ln1_b"],
                  blk["qkv_w"], blk["qkv_b"],
                  blk["proj_w"], blk["proj_b"],
                  blk["ln2_g"], blk["ln2_b"],
                  blk["fc1_w"], blk["fc1_b"],
                  blk["fc2_w"], blk["fc2_b"])

    # VMEM budget computed from the actual slabs (double-buffered per-layer
    # weights + resident state + working values), capped by physical VMEM.
    layer_bytes = sum(int(math.prod(p.shape[1:])) * p.dtype.itemsize
                      for p in param_args)
    M = Bc * T
    work_bytes = 4 * (M * 3 * D + M * hidden
                      + 2 * Bc * num_heads * T * T + 8 * M * D)
    est = (2 * layer_bytes + 2 * Bc * N * D * 4 + Bc * T * D * 4
           + 2 * Bc * D * 4 + work_bytes + (2 << 20))
    try:
        cap = int(0.85 * pltpu.get_tpu_info().vmem_capacity_bytes)
    except Exception:
        cap = 96 * 1024 * 1024
    vmem_limit = int(min(cap, max(32 * 1024 * 1024, est)))

    x_spec = pl.BlockSpec((Bc, N, D), lambda c, l: (c, 0, 0))
    cls_spec = pl.BlockSpec((1, D), lambda c, l: (0, 0))
    pos_spec = pl.BlockSpec((N, D), lambda c, l: (0, 0))
    norm_spec = pl.BlockSpec((1, D), lambda c, l: (0, 0))

    def layer_spec(shape):
        return pl.BlockSpec((1,) + tuple(shape[1:]), lambda c, l: (l, 0, 0))

    cls_out = pl.pallas_call(
        functools.partial(_fused_blocks_kernel, num_heads),
        out_shape=jax.ShapeDtypeStruct((B, 1, D), jnp.float32),
        grid=(num_chunks, L),
        in_specs=([x_spec, cls_spec, pos_spec]
                  + [layer_spec(p.shape) for p in param_args]
                  + [norm_spec, norm_spec]),
        out_specs=pl.BlockSpec((Bc, 1, D), lambda c, l: (c, 0, 0)),
        scratch_shapes=[pltpu.VMEM((Bc, T, D), jnp.float32)],   # resident tokens
        compiler_params=pltpu.CompilerParams(
            dimension_semantics=("parallel", "arbitrary"),
            vmem_limit_bytes=vmem_limit),
    )(tok3, cls_pos, pos_patch, *param_args,
      params["norm_g"], params["norm_b"])

    # DINOv2's forward() returns head(x_norm_clstoken) with head = Identity.
    return {out_features: cls_out[:, 0, :]}                      # (B, D)


def init_dinov2_params(key, *, in_chans, patch_size, embed_dim, depth,
                       num_heads, mlp_ratio, num_tokens):
    assert embed_dim % num_heads == 0
    D = embed_dim
    dh = D // num_heads
    scale = 1.0 / (dh ** 0.5)
    hidden = int(mlp_ratio * D)
    kdim = in_chans * patch_size * patch_size

    keys = jax.random.split(key, 4 + depth)

    def init(k, shp):
        return 0.02 * jax.random.normal(k, shp)

    params = {
        "patch_w": init(keys[0], (kdim, D)).astype(jnp.bfloat16),  # bf16 (MXU)
        "patch_b": jnp.zeros((1, D), jnp.float32),
        "cls_token": init(keys[1], (1, D)).astype(jnp.float32),
        "pos_embed": init(keys[2], (num_tokens, D)).astype(jnp.float32),
        "norm_g": jnp.ones((1, D), jnp.float32),
        "norm_b": jnp.zeros((1, D), jnp.float32),
    }

    ln1_g, ln1_b, qkv_w, qkv_b = [], [], [], []
    proj_w, proj_b, ln2_g, ln2_b = [], [], [], []
    fc1_w, fc1_b, fc2_w, fc2_b = [], [], [], []
    for li in range(depth):
        bk = jax.random.split(keys[4 + li], 4)
        ln1_g.append(jnp.ones((1, D), jnp.float32))
        ln1_b.append(jnp.zeros((1, D), jnp.float32))
        # Fold the 1/sqrt(dh) attention scale into the q-third of qkv_w (and b).
        w = init(bk[0], (D, 3 * D))
        w = w.at[:, :D].multiply(scale)
        qkv_w.append(w.astype(jnp.bfloat16))
        qkv_b.append(jnp.zeros((1, 3 * D), jnp.float32))
        proj_w.append(init(bk[1], (D, D)).astype(jnp.bfloat16))
        proj_b.append(jnp.zeros((1, D), jnp.float32))
        ln2_g.append(jnp.ones((1, D), jnp.float32))
        ln2_b.append(jnp.zeros((1, D), jnp.float32))
        fc1_w.append(init(bk[2], (D, hidden)).astype(jnp.bfloat16))
        fc1_b.append(jnp.zeros((1, hidden), jnp.float32))
        fc2_w.append(init(bk[3], (hidden, D)).astype(jnp.bfloat16))
        fc2_b.append(jnp.zeros((1, D), jnp.float32))

    # Stack per-layer params on a leading depth axis so one pallas_call can
    # iterate layers via a grid axis (weights of layer l+1 prefetch during l).
    params["blocks"] = {
        "ln1_g": jnp.stack(ln1_g), "ln1_b": jnp.stack(ln1_b),
        "qkv_w": jnp.stack(qkv_w), "qkv_b": jnp.stack(qkv_b),
        "proj_w": jnp.stack(proj_w), "proj_b": jnp.stack(proj_b),
        "ln2_g": jnp.stack(ln2_g), "ln2_b": jnp.stack(ln2_b),
        "fc1_w": jnp.stack(fc1_w), "fc1_b": jnp.stack(fc1_b),
        "fc2_w": jnp.stack(fc2_w), "fc2_b": jnp.stack(fc2_b),
    }
    return params


if __name__ == "__main__":
    # Small DINOv2-like config: 16x16 RGB image, patch 8 -> 4 patches + CLS.
    B, C, H, W = 2, 3, 16, 16
    PATCH = 8
    EMBED = 32
    DEPTH = 2
    HEADS = 2
    MLP_RATIO = 4
    N_TOKENS = (H // PATCH) * (W // PATCH) + 1

    key = jax.random.PRNGKey(0)
    k_x, k_p = jax.random.split(key)
    x = jax.random.normal(k_x, (B, C, H, W), dtype=jnp.float32)
    params = init_dinov2_params(k_p, in_chans=C, patch_size=PATCH,
                                embed_dim=EMBED, depth=DEPTH, num_heads=HEADS,
                                mlp_ratio=MLP_RATIO, num_tokens=N_TOKENS)

    out = dinov2_backbone_forward(x, params, patch_size=PATCH, num_heads=HEADS,
                                  out_features="last_feat")
    feat = jax.block_until_ready(out["last_feat"])
    assert feat.shape == (B, EMBED) and feat.dtype == jnp.float32
    print("KERNEL_OK")
</pallas_src>

<mosaic_0001>
module attributes {stable_mosaic.version = 11 : i64} {
  func.func @_patch_embed_kernel(%arg0: i32, %arg1: memref<8x192xbf16, #tpu.memory_space<vmem>>, %arg2: memref<192x32xbf16, #tpu.memory_space<vmem>>, %arg3: memref<1x32xf32, #tpu.memory_space<vmem>>, %arg4: memref<8x32xf32, #tpu.memory_space<vmem>>) attributes {dimension_semantics = [#tpu.dimension_semantics<parallel>], iteration_bounds = array<i64: 1>, scalar_prefetch = 0 : i64, scratch_operands = 0 : i64, tpu.core_type = #tpu.core_type<tc>, window_params = [{transform_indices = @transform_0, window_bounds = array<i64: 8, 192>}, {pipeline_mode = #tpu.pipeline_mode<synchronous>, transform_indices = @transform_1, window_bounds = array<i64: 192, 32>}, {pipeline_mode = #tpu.pipeline_mode<synchronous>, transform_indices = @transform_2, window_bounds = array<i64: 1, 32>}, {transform_indices = @transform_3, window_bounds = array<i64: 8, 32>}]} {
    %c0 = arith.constant 0 : index
    %c0_0 = arith.constant 0 : index
    %0 = vector.load %arg1[%c0, %c0_0] : memref<8x192xbf16, #tpu.memory_space<vmem>>, vector<8x192xbf16>
    %c0_1 = arith.constant 0 : index
    %c0_2 = arith.constant 0 : index
    %1 = vector.load %arg2[%c0_1, %c0_2] : memref<192x32xbf16, #tpu.memory_space<vmem>>, vector<192x32xbf16>
    %cst = arith.constant dense<0.000000e+00> : vector<8x32xf32>
    %2 = tpu.matmul %0, %1, %cst {dimension_numbers = #tpu.dot_dimension_numbers<[1], [0], [0], [1], [0, 0, 1, 1], [], []>} : vector<8x192xbf16>, vector<192x32xbf16>, vector<8x32xf32> -> vector<8x32xf32>
    %c0_3 = arith.constant 0 : index
    %c0_4 = arith.constant 0 : index
    %3 = vector.load %arg3[%c0_3, %c0_4] : memref<1x32xf32, #tpu.memory_space<vmem>>, vector<1x32xf32>
    %4 = vector.broadcast %3 : vector<1x32xf32> to vector<8x32xf32>
    %5 = arith.addf %2, %4 : vector<8x32xf32>
    %c0_5 = arith.constant 0 : index
    %c0_6 = arith.constant 0 : index
    %6 = vector.load %arg4[%c0_5, %c0_6] : memref<8x32xf32, #tpu.memory_space<vmem>>, vector<8x32xf32>
    tpu.vector_store %arg4[%c0_5, %c0_6], %5 {strides = array<i32>} : memref<8x32xf32, #tpu.memory_space<vmem>>, vector<8x32xf32>,
    return
  }
  func.func @transform_0(%arg0: i32) -> (i32, i32) {
    %c0_i32 = arith.constant 0 : i32
    %c0_i32_0 = arith.constant 0 : i32
    return %arg0, %c0_i32 : i32, i32
  }
  func.func @transform_1(%arg0: i32) -> (i32, i32) {
    %c0_i32 = arith.constant 0 : i32
    %c0_i32_0 = arith.constant 0 : i32
    %c0_i32_1 = arith.constant 0 : i32
    return %c0_i32, %c0_i32_0 : i32, i32
  }
  func.func @transform_2(%arg0: i32) -> (i32, i32) {
    %c0_i32 = arith.constant 0 : i32
    %c0_i32_0 = arith.constant 0 : i32
    %c0_i32_1 = arith.constant 0 : i32
    return %c0_i32, %c0_i32_0 : i32, i32
  }
  func.func @transform_3(%arg0: i32) -> (i32, i32) {
    %c0_i32 = arith.constant 0 : i32
    %c0_i32_0 = arith.constant 0 : i32
    return %arg0, %c0_i32 : i32, i32
  }
}

</mosaic_0001>

<llo_original>
// kernel: tpu_custom_call.1
$region0: #{tpu_custom_call.1}
  #allocation0 [shape = 'u32[]', space=smem, size = 0x4, offset = 0x4, fixed_abs, tag = 'smem constant byte address 0x4 - core index']
  #allocation1 [shape = 'u32[144,128]{1,0:T(1,128)}', space=vmem, size = 0x12000, scoped, tag = 'internal scratch']
  %s0 = inlined_call_operand.vmem [shape: bf16[8,192], index: 0, kind: input, shape index: {}]
  %s1 = inlined_call_operand.vmem [shape: bf16[192,32], index: 1, kind: input, shape index: {}]
  %s2 = inlined_call_operand.vmem [shape: f32[1,32], index: 2, kind: input, shape index: {}]
  %s3 = inlined_call_operand.hbm [shape: f32[8,32], index: 3, kind: output, shape index: {}]
  %s4 = sld [smem:[#allocation0]]
  $region22: #{tpu_custom_call.1} parent=0
    _
  %s6 = ssub.s32 1, %s4
  %s7 = scalar_select 0, %s6, %s4
  $region1: #{tpu_custom_call.1} parent=0
    #allocation2 [shape = 'u8[4096]{0}', space=vmem, size = 0x1000, scoped, tag = 'output window, operand 0, single buffered']
    #allocation3 [shape = 's32[1]{0}', space=sflag, size = 0x4, scoped, tag = 'scoped memory for tpu_custom_call.1']
    %8 = vsyncpa [#allocation3], 0
    // Predicated region
    $region2: #{tpu_custom_call.1} parent=1 // pred_check
      _
    $region3: #{tpu_custom_call.1} parent=1 // pred_check_branch
      %10 = sbr.rel (0) target = $region5
    $region4: #{tpu_custom_call.1} parent=1 // pred_region
      _
    $region5: #{tpu_custom_call.1} parent=1 // pred_fallthru
      _
    // Predicated region
    $region6: #{tpu_custom_call.1} parent=1 // pred_check
      _
    $region7: #{tpu_custom_call.1} parent=1 // pred_check_branch
      %12 = sbr.rel (0) target = $region9
    $region8: #{tpu_custom_call.1} parent=1 // pred_region
      _
    $region9: #{tpu_custom_call.1} parent=1 // pred_fallthru
      _
    // Predicated region
    $region10: #{tpu_custom_call.1} parent=1 // pred_check
      _
    $region11: #{tpu_custom_call.1} parent=1 // pred_check_branch
      %14 = sbr.rel (0) target = $region13
    $region12: #{tpu_custom_call.1} parent=1 // pred_region
      _
    $region13: #{tpu_custom_call.1} parent=1 // pred_fallthru
      _
    %v16 = vld [vmem:[%s0] sm:$0xff]
    %v17 = vld [vmem:[%s1] sm:$0xf]
    %v18 = vld [vmem:[%s1 + $0x4] sm:$0xf]
    %v19 = vld [vmem:[%s1 + $0x8] sm:$0xf]
    %v20 = vld [vmem:[%s1 + $0xc] sm:$0xf]
    %v21 = vld [vmem:[%s1 + $0x10] sm:$0xf]
    %v22 = vld [vmem:[%s1 + $0x14] sm:$0xf]
    %v23 = vld [vmem:[%s1 + $0x18] sm:$0xf]
    %v24 = vld [vmem:[%s1 + $0x1c] sm:$0xf]
    %v25 = vld [vmem:[%s1 + $0x20] sm:$0xf]
    %v26 = vld [vmem:[%s1 + $0x24] sm:$0xf]
    %v27 = vld [vmem:[%s1 + $0x28] sm:$0xf]
    %v28 = vld [vmem:[%s1 + $0x2c] sm:$0xf]
    %v29 = vld [vmem:[%s1 + $0x30] sm:$0xf]
    %v30 = vld [vmem:[%s1 + $0x34] sm:$0xf]
    %v31 = vld [vmem:[%s1 + $0x38] sm:$0xf]
    %v32 = vld [vmem:[%s1 + $0x3c] sm:$0xf]
    %v33 = vld [vmem:[%s1 + $0x40] sm:$0xf]
    %v34 = vld [vmem:[%s1 + $0x44] sm:$0xf]
    %v35 = vld [vmem:[%s1 + $0x48] sm:$0xf]
    %v36 = vld [vmem:[%s1 + $0x4c] sm:$0xf]
    %v37 = vld [vmem:[%s1 + $0x50] sm:$0xf]
    %v38 = vld [vmem:[%s1 + $0x54] sm:$0xf]
    %v39 = vld [vmem:[%s1 + $0x58] sm:$0xf]
    %v40 = vld [vmem:[%s1 + $0x5c] sm:$0xf]
    %v41 = vld [vmem:[%s2] sm:$0x1]
    %v43 = vlaneseq
    %v44 = vshrl.u32 %v43, 7
    %v45 = vsub.s32 0, %v44
    %v46 = vrot.slane %v41, %v45
    %v49 = vunpack.c.l.b16 %v16
    %v50 = vunpack.c.h.b16 %v16
    %v51 = vpack.c.b16 %v49, %v49
    %v52 = vpack.c.b16 %v50, %v50
    %v78 = vunpack.c.l.b16 %v17
    %v79 = vunpack.c.l.b16 %v18
    %v80 = vunpack.c.l.b16 %v19
    %v81 = vunpack.c.l.b16 %v20
    %v82 = vunpack.c.l.b16 %v21
    %v83 = vunpack.c.l.b16 %v22
    %v84 = vunpack.c.l.b16 %v23
    %v85 = vunpack.c.l.b16 %v24
    %v86 = vunpack.c.l.b16 %v25
    %v87 = vunpack.c.l.b16 %v26
    %v88 = vunpack.c.l.b16 %v27
    %v89 = vunpack.c.l.b16 %v28
    %v90 = vunpack.c.l.b16 %v29
    %v91 = vunpack.c.l.b16 %v30
    %v92 = vunpack.c.l.b16 %v31
    %v93 = vunpack.c.l.b16 %v32
    %v94 = vunpack.c.l.b16 %v33
    %v95 = vunpack.c.l.b16 %v34
    %v96 = vunpack.c.l.b16 %v35
    %v97 = vunpack.c.l.b16 %v36
    %v98 = vunpack.c.l.b16 %v37
    %v99 = vunpack.c.l.b16 %v38
    %v100 = vunpack.c.l.b16 %v39
    %v101 = vunpack.c.l.b16 %v40
    %v102 = vpack.c.b16 %v79, %v78
    %v103 = vpack.c.b16 %v81, %v80
    %v104 = vpack.c.b16 %v83, %v82
    %v105 = vpack.c.b16 %v85, %v84
    %v106 = vpack.c.b16 %v87, %v86
    %v107 = vpack.c.b16 %v89, %v88
    %v108 = vpack.c.b16 %v91, %v90
    %v109 = vpack.c.b16 %v93, %v92
    %v110 = vpack.c.b16 %v95, %v94
    %v111 = vpack.c.b16 %v97, %v96
    %v112 = vpack.c.b16 %v99, %v98
    %v113 = vpack.c.b16 %v101, %v100
    %vm126 = vcmask 523264
    %v128 = vsel %vm126, %v52, 0
    %130 = vmatprep.subr.bf16.mxu0 0
    %131 = vmatpush1.bf16.msra.mxu0 %v102
    %132 = vmatprep.subr.bf16.mxu0 0
    %133 = vmatpush1.bf16.msra.mxu0 %v103
    %134 = vmatprep.subr.bf16.mxu0 0
    %135 = vmatpush1.bf16.msra.mxu0 %v104
    %136 = vmatprep.subr.bf16.mxu0 0
    %137 = vmatpush1.bf16.msra.mxu0 %v105
    %138 = vmatprep.subr.bf16.mxu0 0
    %139 = vmatpush1.bf16.msra.mxu0 %v106
    %140 = vmatprep.subr.bf16.mxu0 0
    %141 = vmatpush1.bf16.msra.mxu0 %v107
    %142 = vmatprep.subr.bf16.mxu0 0
    %143 = vmatpush1.bf16.msra.mxu0 %v108
    %144 = vmatprep.subr.bf16.mxu0 0
    %145 = vmatpush1.bf16.msra.mxu0 %v109
    %146 = vmatprep.subr.bf16.mxu0 0
    %147 = vmatpush1.bf16.msra.mxu0 %v110
    %148 = vmatprep.subr.bf16.mxu0 0
    %149 = vmatpush1.bf16.msra.mxu0 %v111
    %150 = vmatprep.subr.bf16.mxu0 0
    %151 = vmatpush1.bf16.msra.mxu0 %v112
    %152 = vmatprep.subr.bf16.mxu0 0
    %153 = vmatpush1.bf16.msra.mxu0 %v113
    %154 = vmatprep.subr.bf16.mxu0 0
    %155 = vmatpush1.bf16.msra.mxu0 0
    %156 = vmatprep.subr.bf16.mxu0 0
    %157 = vmatpush1.bf16.msra.mxu0 0
    %158 = vmatprep.subr.bf16.mxu0 0
    %159 = vmatpush1.bf16.msra.mxu0 0
    %160 = vmatprep.subr.bf16.mxu0 0
    %161 = vmatpush1.bf16.msra.mxu0 0
    %162 = vmatprep.mubr.bf16.mxu0 %v128
    %163 = vmatmul.mubr.bf16.gmra.mrb[0].mxu0 %v51
    %v164 = vpop.f32.mrb[0].mxu0
    %v165 = vadd.f32 %v46, %v164
    %v166 = vpop.f32.mrb[0].mxu0
    %v167 = vpop.f32.mrb[0].mxu0
    %v168 = vpop.f32.mrb[0].mxu0
    %169 = vdwg.mxu0
    %vm170 = vcmask 261120
    %171 = vst.msk [vmem:[#allocation2] sm:$0xff] %vm170, %v165
    // Predicated region
    $region14: #{tpu_custom_call.1} parent=1 // pred_check
      _
    $region15: #{tpu_custom_call.1} parent=1 // pred_check_branch
      %173 = sbr.rel (0) target = $region17
    $region16: #{tpu_custom_call.1} parent=1 // pred_region
      %s175 = ssub.s32 128, 128
      %176 = vsyncadd [#allocation3], %s175
      %s178 = sshll.u32 [#allocation2], 4
      %s179 = int_to_ptr.vmem [resolvable:$true] %s178
      %181 = dma.vmem_to_hbm [thread:$0]  %s179, 128, %s3, [#allocation3]
    $region17: #{tpu_custom_call.1} parent=1 // pred_fallthru
      _
    // Predicated region
    $region18: #{tpu_custom_call.1} parent=1 // pred_check
      _
    $region19: #{tpu_custom_call.1} parent=1 // pred_check_branch
      %183 = sbr.rel (0) target = $region21
    $region20: #{tpu_custom_call.1} parent=1 // pred_region
      %184 = dma.done [#allocation3], 128
    $region21: #{tpu_custom_call.1} parent=1 // pred_fallthru
      _
    %185 = vsyncpa [#allocation3], 1

</llo_original>
